<compile_context>
chip_gen: v7x
topology: tpu7x:2x2x1
jax: 0.10.0
libtpu: 0.0.40
codegen_flags: <defaults>
</compile_context>

<pallas_src>
import functools

import jax
import jax.numpy as jnp
from jax.experimental import pallas as pl
from jax.experimental.pallas import tpu as pltpu

_LANE = 128
_SUBLANE = 8


def _relu_in2d_kernel(x_ref, o_ref, *, eps: float, valid_cols: int, inv_count: float):
    # x_ref / o_ref: (ROWS, P_pad) — each row is one (n, c) instance plane.
    x = x_ref[...].astype(jnp.float32)
    y = jnp.maximum(x, 0.0)                                   # ReLU (VPU)

    padded = valid_cols != x.shape[-1]
    if padded:
        col = jax.lax.broadcasted_iota(jnp.int32, x.shape, dimension=1)
        mask = col < valid_cols
        y = jnp.where(mask, y, 0.0)

    # Per-row statistics over the true H*W elements (biased variance, like
    # torch.nn.InstanceNorm2d). Centered two-pass form kept for numerics.
    mean = jnp.sum(y, axis=-1, keepdims=True) * inv_count     # XLU reduce
    centered = y - mean
    if padded:
        centered = jnp.where(mask, centered, 0.0)
    var = jnp.sum(centered * centered, axis=-1, keepdims=True) * inv_count
    inv = jax.lax.rsqrt(var + eps)                            # EUP (free slot)
    o_ref[...] = (centered * inv).astype(o_ref.dtype)


def relu_in2d(x: jax.Array, *, eps: float = 1e-5) -> jax.Array:
    """ReLU followed by InstanceNorm2d (affine=False). x: (N, C, H, W)."""
    N, C, H, W = x.shape
    M = N * C                       # number of instances
    P = H * W                       # elements per instance plane
    itemsize = jnp.dtype(x.dtype).itemsize

    # Lane-dense last dim: pad plane length to a multiple of 128.
    P_pad = pl.cdiv(P, _LANE) * _LANE
    row_bytes = P_pad * itemsize

    # Rows per block: target ~1 MiB blocks, multiple of 8 (sublane tiling),
    # never (much) more than the number of instances.
    target_block_bytes = 1 << 20
    rows = min(max(1, target_block_bytes // row_bytes), M)
    rows = pl.cdiv(rows, _SUBLANE) * _SUBLANE
    M_pad = pl.cdiv(M, rows) * rows

    x2 = x.reshape(M, P)
    if M_pad != M or P_pad != P:
        # Zero padding: padded rows normalize to 0 (var=0 -> rsqrt(eps) finite)
        # and are sliced off; padded cols are masked out of the stats in-kernel.
        x2 = jnp.pad(x2, ((0, M_pad - M), (0, P_pad - P)))

    block_bytes = rows * row_bytes
    # in+out, double-buffered, plus headroom; fits every generation's default
    # scoped limit for ~1-2 MiB blocks but set explicitly anyway.
    vmem_limit_bytes = int(min(max(16 << 20, 6 * block_bytes), 48 << 20))
    # TODO(synk): for very large planes (row_bytes >~ 4 MiB, e.g. 1024x1024 f32
    # on v7x's 64 MiB VMEM) switch to a two-pass scheme that streams H-tiles
    # accumulating sum/sumsq before a second normalization sweep.

    kernel = functools.partial(
        _relu_in2d_kernel, eps=eps, valid_cols=P, inv_count=1.0 / P
    )

    out = pl.pallas_call(
        kernel,
        out_shape=jax.ShapeDtypeStruct((M_pad, P_pad), x.dtype),
        grid_spec=pltpu.PrefetchScalarGridSpec(
            num_scalar_prefetch=0,
            grid=(M_pad // rows,),
            in_specs=[pl.BlockSpec((rows, P_pad), lambda i: (i, 0))],
            out_specs=pl.BlockSpec((rows, P_pad), lambda i: (i, 0)),
        ),
        compiler_params=pltpu.CompilerParams(
            dimension_semantics=("parallel",),
            vmem_limit_bytes=vmem_limit_bytes,
        ),
    )(x2)

    return out[:M, :P].reshape(N, C, H, W)


def _reference(x: jax.Array, eps: float = 1e-5) -> jax.Array:
    y = jnp.maximum(x, 0.0)
    mean = jnp.mean(y, axis=(2, 3), keepdims=True)
    var = jnp.mean((y - mean) ** 2, axis=(2, 3), keepdims=True)
    return (y - mean) / jnp.sqrt(var + eps)


if __name__ == "__main__":
    # NOTE: affine=False -> InstanceNorm2d has no learnable weight/bias params.
    key = jax.random.PRNGKey(0)
    N, C, H, W = 2, 4, 16, 16
    x = jax.random.normal(key, (N, C, H, W), dtype=jnp.float32)

    out = relu_in2d(x)
    out = jax.block_until_ready(out)

    ref = _reference(x)
    assert out.shape == (N, C, H, W)
    assert jnp.allclose(out, ref, atol=1e-5, rtol=1e-5), "mismatch vs reference"
    print("KERNEL_OK")
</pallas_src>

<mosaic_0001>
module attributes {stable_mosaic.version = 11 : i64} {
  func.func @_relu_in2d_kernel(%arg0: i32, %arg1: memref<8x256xf32, #tpu.memory_space<vmem>>, %arg2: memref<8x256xf32, #tpu.memory_space<vmem>>) attributes {dimension_semantics = [#tpu.dimension_semantics<parallel>], iteration_bounds = array<i64: 1>, scalar_prefetch = 0 : i64, scratch_operands = 0 : i64, tpu.core_type = #tpu.core_type<tc>, window_params = [{transform_indices = @transform_0, window_bounds = array<i64: 8, 256>}, {transform_indices = @transform_1, window_bounds = array<i64: 8, 256>}]} {
    %c0 = arith.constant 0 : index
    %c0_0 = arith.constant 0 : index
    %0 = vector.load %arg1[%c0, %c0_0] : memref<8x256xf32, #tpu.memory_space<vmem>>, vector<8x256xf32>
    %cst = arith.constant 0.000000e+00 : f32
    %1 = vector.broadcast %cst : f32 to vector<8x256xf32>
    %2 = arith.maximumf %0, %1 : vector<8x256xf32>
    %cst_1 = arith.constant dense<0.000000e+00> : vector<8xf32>
    %3 = vector.multi_reduction <add>, %2, %cst_1 [1] : vector<8x256xf32> to vector<8xf32>
    %4 = vector.shape_cast %3 : vector<8xf32> to vector<8x1xf32>
    %cst_2 = arith.constant 3.906250e-03 : f32
    %5 = vector.broadcast %cst_2 : f32 to vector<8x1xf32>
    %6 = arith.mulf %4, %5 : vector<8x1xf32>
    %7 = vector.broadcast %6 : vector<8x1xf32> to vector<8x256xf32>
    %8 = arith.subf %2, %7 : vector<8x256xf32>
    %9 = arith.mulf %8, %8 : vector<8x256xf32>
    %cst_3 = arith.constant dense<0.000000e+00> : vector<8xf32>
    %10 = vector.multi_reduction <add>, %9, %cst_3 [1] : vector<8x256xf32> to vector<8xf32>
    %11 = vector.shape_cast %10 : vector<8xf32> to vector<8x1xf32>
    %cst_4 = arith.constant 3.906250e-03 : f32
    %12 = vector.broadcast %cst_4 : f32 to vector<8x1xf32>
    %13 = arith.mulf %11, %12 : vector<8x1xf32>
    %cst_5 = arith.constant 9.99999974E-6 : f32
    %14 = vector.broadcast %cst_5 : f32 to vector<8x1xf32>
    %15 = arith.addf %13, %14 : vector<8x1xf32>
    %16 = math.rsqrt %15 : vector<8x1xf32>
    %17 = vector.broadcast %16 : vector<8x1xf32> to vector<8x256xf32>
    %18 = arith.mulf %8, %17 : vector<8x256xf32>
    %c0_6 = arith.constant 0 : index
    %c0_7 = arith.constant 0 : index
    %19 = vector.load %arg2[%c0_6, %c0_7] : memref<8x256xf32, #tpu.memory_space<vmem>>, vector<8x256xf32>
    tpu.vector_store %arg2[%c0_6, %c0_7], %18 {strides = array<i32>} : memref<8x256xf32, #tpu.memory_space<vmem>>, vector<8x256xf32>,
    return
  }
  func.func @transform_0(%arg0: i32) -> (i32, i32) {
    %c0_i32 = arith.constant 0 : i32
    %c0_i32_0 = arith.constant 0 : i32
    return %arg0, %c0_i32 : i32, i32
  }
  func.func @transform_1(%arg0: i32) -> (i32, i32) {
    %c0_i32 = arith.constant 0 : i32
    %c0_i32_0 = arith.constant 0 : i32
    return %arg0, %c0_i32 : i32, i32
  }
}

</mosaic_0001>

<llo_original>
// kernel: tpu_custom_call.1
$region0: #{tpu_custom_call.1}
  #allocation0 [shape = 'u32[]', space=smem, size = 0x4, offset = 0x4, fixed_abs, tag = 'smem constant byte address 0x4 - core index']
  #allocation1 [shape = 'u32[144,128]{1,0:T(1,128)}', space=vmem, size = 0x12000, scoped, tag = 'internal scratch']
  %s0 = inlined_call_operand.hbm [shape: f32[8,256], index: 0, kind: input, shape index: {}]
  %s1 = inlined_call_operand.hbm [shape: f32[8,256], index: 1, kind: output, shape index: {}]
  %s2 = sld [smem:[#allocation0]]
  $region18: #{tpu_custom_call.1} parent=0
    _
  %s4 = ssub.s32 1, %s2
  %s5 = scalar_select 0, %s4, %s2
  $region1: #{tpu_custom_call.1} parent=0
    #allocation2 [shape = 'u8[8192]{0}', space=vmem, size = 0x2000, scoped, tag = 'input window, operand 0, single buffered']
    #allocation3 [shape = 's32[1]{0}', space=sflag, size = 0x4, scoped, tag = 'scoped memory for tpu_custom_call.1']
    #allocation4 [shape = 's32[1]{0}', space=sflag, size = 0x4, scoped, tag = 'scoped memory for tpu_custom_call.1']
    #allocation5 [shape = 'u8[8192]{0}', space=vmem, size = 0x2000, scoped, tag = 'output window, operand 0, single buffered']
    %6 = vsyncpa [#allocation3], 0
    %7 = vsyncpa [#allocation4], 0
    // Predicated region
    $region2: #{tpu_custom_call.1} parent=1 // pred_check
      _
    $region3: #{tpu_custom_call.1} parent=1 // pred_check_branch
      %9 = sbr.rel (0) target = $region5
    $region4: #{tpu_custom_call.1} parent=1 // pred_region
      %s11 = ssub.s32 256, 256
      %12 = vsyncadd [#allocation3], %s11
      %s14 = sshll.u32 [#allocation2], 4
      %s15 = int_to_ptr.vmem [resolvable:$true] %s14
      %17 = dma.hbm_to_vmem [thread:$0]  %s0, 256, %s15, [#allocation3]
    $region5: #{tpu_custom_call.1} parent=1 // pred_fallthru
      _
    // Predicated region
    $region6: #{tpu_custom_call.1} parent=1 // pred_check
      _
    $region7: #{tpu_custom_call.1} parent=1 // pred_check_branch
      %19 = sbr.rel (0) target = $region9
    $region8: #{tpu_custom_call.1} parent=1 // pred_region
      %20 = dma.done [#allocation3], 256
    $region9: #{tpu_custom_call.1} parent=1 // pred_fallthru
      _
    %v21 = vld [vmem:[#allocation2] sm:$0xff]
    %v22 = vld [vmem:[#allocation2 + $0x8] sm:$0xff]
    %v23 = vmax.f32 %v21, 0.0
    %v24 = vmax.f32 %v22, 0.0
    %v25 = vadd.f32 %v23, %v24
    %26 = vadd.xlane.f32.xlu0 %v25
    %v27 = vpop.xlane.xlu0 %26
    %v28 = vmul.f32 %v27, 0.00390625
    %v29 = vsub.f32 %v23, %v28
    %v30 = vsub.f32 %v24, %v28
    %v31 = vmul.f32 %v29, %v29
    %v32 = vmul.f32 %v30, %v30
    %v33 = vadd.f32 %v31, %v32
    %34 = vadd.xlane.f32.xlu0 %v33
    %v35 = vpop.xlane.xlu0 %34
    %v36 = vmul.f32 %v35, 0.00390625
    %v37 = vadd.f32 %v36, 1e-05
    %v38 = vrsqrt.pop %v37
    %v39 = vmul.f32 %v29, %v38
    %v40 = vmul.f32 %v30, %v38
    %41 = vst [vmem:[#allocation5] sm:$0xff] %v39
    %42 = vst [vmem:[#allocation5 + $0x8] sm:$0xff] %v40
    // Predicated region
    $region10: #{tpu_custom_call.1} parent=1 // pred_check
      _
    $region11: #{tpu_custom_call.1} parent=1 // pred_check_branch
      %44 = sbr.rel (0) target = $region13
    $region12: #{tpu_custom_call.1} parent=1 // pred_region
      %s46 = ssub.s32 256, 256
      %47 = vsyncadd [#allocation4], %s46
      %s49 = sshll.u32 [#allocation5], 4
      %s50 = int_to_ptr.vmem [resolvable:$true] %s49
      %52 = dma.vmem_to_hbm [thread:$0]  %s50, 256, %s1, [#allocation4]
    $region13: #{tpu_custom_call.1} parent=1 // pred_fallthru
      _
    // Predicated region
    $region14: #{tpu_custom_call.1} parent=1 // pred_check
      _
    $region15: #{tpu_custom_call.1} parent=1 // pred_check_branch
      %54 = sbr.rel (0) target = $region17
    $region16: #{tpu_custom_call.1} parent=1 // pred_region
      %55 = dma.done [#allocation4], 256
    $region17: #{tpu_custom_call.1} parent=1 // pred_fallthru
      _
    %56 = vsyncpa [#allocation3], 1
    %57 = vsyncpa [#allocation4], 1

</llo_original>
